<compile_context>
chip_gen: v7x
topology: tpu7x:2x2x1
jax: 0.10.0
libtpu: 0.0.40
codegen_flags: <defaults>
</compile_context>

<pallas_src>
import functools
import math

import jax
import jax.numpy as jnp
from jax import lax
from jax.experimental import pallas as pl
from jax.experimental.pallas import tpu as pltpu


def _i32(x):
    """Python int carrying the signed-int32 value of an unsigned 32-bit constant."""
    x &= 0xFFFFFFFF
    return x - (1 << 32) if x >= (1 << 31) else x


_MUL1 = _i32(0x85EBCA6B)
_MUL2 = _i32(0xC2B2AE35)
_SALT1 = _i32(0x9E3779B9)
_SALT2 = _i32(0x7F4A7C15)


def _lsr(x, k):
    """Logical shift-right for int32 (arithmetic shift + mask of sign bits)."""
    return (x >> k) & ((1 << (32 - k)) - 1)


def _mix32(x):
    """murmur3 finalizer on int32 (int32 multiply wraps mod 2^32 by design)."""
    x = x ^ _lsr(x, 16)
    x = x * jnp.int32(_MUL1)
    x = x ^ _lsr(x, 13)
    x = x * jnp.int32(_MUL2)
    x = x ^ _lsr(x, 16)
    return x


def _uniform01(bits):
    """Top 24 bits of an int32 -> uniform float32 in [0, 1)."""
    return _lsr(bits, 8).astype(jnp.float32) * jnp.float32(1.0 / (1 << 24))


# ----------------------------------------------------------------------------
# Kernels
# ----------------------------------------------------------------------------
def _gaussian_noise_hw_kernel(seed_ref, x_ref, o_ref, *, std):
    """Hardware-PRNG path: HBM-bound streaming add of N(0, std^2) noise."""
    # Per-block seed: decorrelated across grid steps, so the output does not
    # depend on which TensorCore executes which block ("parallel" semantics).
    block_seed = _mix32(
        seed_ref[0] ^ ((pl.program_id(0) + jnp.int32(1)) * jnp.int32(_SALT1))
    )
    pltpu.prng_seed(block_seed)
    noise = pltpu.stateful_normal(x_ref.shape, jnp.float32)
    o_ref[...] = (
        x_ref[...].astype(jnp.float32) + noise * jnp.float32(std)
    ).astype(o_ref.dtype)


def _gaussian_noise_sw_kernel(seed_ref, x_ref, o_ref, *, std):
    """Counter-based fallback (non-TPU backends / interpret mode only).

    Stateless murmur3-style hash of the flat element index + Box-Muller.
    std is folded into r before the trig multiply; the block base index is a
    single scalar (hoisted out of the per-element math).
    """
    rb, lane = x_ref.shape
    base = pl.program_id(0) * jnp.int32(rb * lane)  # scalar flat offset
    s1 = _mix32(seed_ref[0] ^ jnp.int32(_SALT1))
    s2 = _mix32(seed_ref[0] ^ jnp.int32(_SALT2))

    lr = lax.broadcasted_iota(jnp.int32, (rb, lane), 0)
    lc = lax.broadcasted_iota(jnp.int32, (rb, lane), 1)
    idx = base + lr * jnp.int32(lane) + lc

    u1 = _uniform01(_mix32(idx ^ s1))
    u2 = _uniform01(_mix32(idx ^ s2))
    # 1 - u1 is in (0, 1], so log() is always finite.
    r_s = jnp.float32(std) * jnp.sqrt(-2.0 * jnp.log(1.0 - u1))
    theta = jnp.float32(2.0 * math.pi) * u2
    z = r_s * jnp.cos(theta)

    o_ref[...] = (x_ref[...].astype(jnp.float32) + z).astype(o_ref.dtype)


# ----------------------------------------------------------------------------
# Tiling helpers
# ----------------------------------------------------------------------------
def _pick_lane(total):
    """Largest canonical lane width (multiple of 128) that divides `total`."""
    for cand in (1024, 512, 256, 128):
        if total % cand == 0:
            return cand, 0
    lane = 128
    padded = -(-total // lane) * lane
    return lane, padded - total


def _pick_row_block(rows, lane, itemsize, target_bytes=2 << 20):
    """Sublane-aligned row block of ~target_bytes, preferring an exact divisor
    of `rows`, and (when possible) at least 2 grid steps for v7x megacore."""
    sublane = {4: 8, 2: 16, 1: 32}.get(itemsize, 8)
    if rows <= sublane:
        return rows
    rb = max(1, target_bytes // max(1, lane * itemsize))
    if rb >= rows:
        # Whole array would fit in one block; split in two (when possible) so
        # dimension_semantics=("parallel",) actually shards across both TCs.
        rb = rows // 2 if rows >= 2 * sublane else rows
    rb = min(rb, rows)
    rb = max(sublane, (rb // sublane) * sublane)
    # Prefer an exact divisor of rows (avoids a padded trailing block).
    cand = rb
    while cand > sublane and rows % cand != 0:
        cand -= sublane
    if rows % cand == 0:
        return cand
    return rb  # trailing partial block handled by Pallas block clipping


# ----------------------------------------------------------------------------
# Wrapper
# ----------------------------------------------------------------------------
def gaussian_noise_1d(signal, seed, std=0.1):
    """Pallas equivalent of GaussianNoise1D.forward: signal + N(0, std^2)."""
    orig_shape = signal.shape
    dtype = signal.dtype
    itemsize = dtype.itemsize
    total = math.prod(orig_shape) if orig_shape else 1

    lane, pad = _pick_lane(total)
    if pad:
        flat = jnp.ravel(signal)
        flat = jnp.pad(flat, (0, pad))
        x2d = flat.reshape((total + pad) // lane, lane)
    else:
        x2d = signal.reshape(total // lane, lane)  # free reshape (contiguous)

    rows = x2d.shape[0]
    rb = _pick_row_block(rows, lane, itemsize)
    grid = (pl.cdiv(rows, rb),)
    n_elem = rows * lane
    seed_arr = jnp.asarray([seed], dtype=jnp.int32)

    def _call(kernel, transcendentals):
        cost = pl.CostEstimate(
            flops=8 * n_elem,
            transcendentals=transcendentals,
            bytes_accessed=2 * n_elem * itemsize,
        )
        return pl.pallas_call(
            kernel,
            out_shape=jax.ShapeDtypeStruct((rows, lane), dtype),
            grid_spec=pltpu.PrefetchScalarGridSpec(
                num_scalar_prefetch=1,
                grid=grid,
                in_specs=[pl.BlockSpec((rb, lane), lambda i, _seed: (i, 0))],
                out_specs=pl.BlockSpec((rb, lane), lambda i, _seed: (i, 0)),
            ),
            compiler_params=pltpu.CompilerParams(
                # Noise is a pure function of (seed, grid step), so grid steps
                # are independent -> megacore sharding on v7x.
                dimension_semantics=("parallel",),
                vmem_limit_bytes=32 * 1024 * 1024,
            ),
            cost_estimate=cost,
        )(seed_arr, x2d)

    on_tpu = jax.devices()[0].platform == "tpu"
    out2d = None
    if on_tpu:
        try:
            out2d = _call(
                functools.partial(_gaussian_noise_hw_kernel, std=float(std)), 0
            )
            out2d = jax.block_until_ready(out2d)
        except Exception:
            out2d = None  # fall back to the software path below
    if out2d is None:
        out2d = _call(
            functools.partial(_gaussian_noise_sw_kernel, std=float(std)),
            2 * n_elem,
        )

    if pad:
        return out2d.reshape(-1)[:total].reshape(orig_shape)
    return out2d.reshape(orig_shape)


# ----------------------------------------------------------------------------
# Self-test
# ----------------------------------------------------------------------------
if __name__ == "__main__":
    key = jax.random.PRNGKey(0)
    std = 0.1

    # Case 1: small (N, C, L); total elements divisible by 1024 -> (2, 1024).
    x1 = jax.random.normal(key, (2, 4, 256), dtype=jnp.float32)
    y1 = jax.block_until_ready(gaussian_noise_1d(x1, seed=1234, std=std))
    assert y1.shape == x1.shape and y1.dtype == x1.dtype
    n1 = y1 - x1
    assert abs(float(jnp.mean(n1))) < 0.05, f"noise mean off: {float(jnp.mean(n1))}"
    assert 0.05 < float(jnp.std(n1)) < 0.2, f"noise std off: {float(jnp.std(n1))}"

    # Case 2: more rows -> (8, 1024) lane-dense layout, full block.
    x2 = jax.random.normal(jax.random.PRNGKey(1), (2, 16, 256), dtype=jnp.float32)
    y2 = jax.block_until_ready(gaussian_noise_1d(x2, seed=7, std=std))
    assert y2.shape == x2.shape and y2.dtype == x2.dtype
    n2 = y2 - x2
    assert abs(float(jnp.mean(n2))) < 0.05, f"noise mean off: {float(jnp.mean(n2))}"
    assert 0.05 < float(jnp.std(n2)) < 0.2, f"noise std off: {float(jnp.std(n2))}"

    # Case 3: awkward L (not 128-aligned, total not lane-divisible) -> exercises
    # the pad + slice path and a partial trailing block.
    x3 = jax.random.normal(jax.random.PRNGKey(2), (3, 5, 100), dtype=jnp.float32)
    y3 = jax.block_until_ready(gaussian_noise_1d(x3, seed=99, std=std))
    assert y3.shape == x3.shape and y3.dtype == x3.dtype
    n3 = y3 - x3
    assert abs(float(jnp.mean(n3))) < 0.05, f"noise mean off: {float(jnp.mean(n3))}"
    assert 0.05 < float(jnp.std(n3)) < 0.2, f"noise std off: {float(jnp.std(n3))}"

    print("KERNEL_OK")
</pallas_src>

<mosaic_0001>
module attributes {stable_mosaic.version = 11 : i64} {
  func.func @_gaussian_noise_sw_kernel(%arg0: i32, %arg1: memref<1xi32, #tpu.memory_space<smem>>, %arg2: memref<2x1024xf32, #tpu.memory_space<vmem>>, %arg3: memref<2x1024xf32, #tpu.memory_space<vmem>>) attributes {dimension_semantics = [#tpu.dimension_semantics<parallel>], iteration_bounds = array<i64: 1>, scalar_prefetch = 1 : i64, scratch_operands = 0 : i64, tpu.core_type = #tpu.core_type<tc>, window_params = [{transform_indices = @transform_0, window_bounds = array<i64: 2, 1024>}, {transform_indices = @transform_1, window_bounds = array<i64: 2, 1024>}]} {
    %c2048_i32 = arith.constant 2048 : i32
    %0 = arith.muli %arg0, %c2048_i32 : i32
    %c0 = arith.constant 0 : index
    %1 = memref.load %arg1[%c0] : memref<1xi32, #tpu.memory_space<smem>>
    %c-1640531527_i32 = arith.constant -1640531527 : i32
    %2 = arith.xori %1, %c-1640531527_i32 : i32
    %c16_i32 = arith.constant 16 : i32
    %3 = arith.shrsi %2, %c16_i32 : i32
    %c65535_i32 = arith.constant 65535 : i32
    %4 = arith.andi %3, %c65535_i32 : i32
    %5 = arith.xori %2, %4 : i32
    %c-2048144789_i32 = arith.constant -2048144789 : i32
    %6 = arith.muli %5, %c-2048144789_i32 : i32
    %c13_i32 = arith.constant 13 : i32
    %7 = arith.shrsi %6, %c13_i32 : i32
    %c524287_i32 = arith.constant 524287 : i32
    %8 = arith.andi %7, %c524287_i32 : i32
    %9 = arith.xori %6, %8 : i32
    %c-1028477387_i32 = arith.constant -1028477387 : i32
    %10 = arith.muli %9, %c-1028477387_i32 : i32
    %c16_i32_0 = arith.constant 16 : i32
    %11 = arith.shrsi %10, %c16_i32_0 : i32
    %c65535_i32_1 = arith.constant 65535 : i32
    %12 = arith.andi %11, %c65535_i32_1 : i32
    %13 = arith.xori %10, %12 : i32
    %c0_2 = arith.constant 0 : index
    %14 = memref.load %arg1[%c0_2] : memref<1xi32, #tpu.memory_space<smem>>
    %c2135587861_i32 = arith.constant 2135587861 : i32
    %15 = arith.xori %14, %c2135587861_i32 : i32
    %c16_i32_3 = arith.constant 16 : i32
    %16 = arith.shrsi %15, %c16_i32_3 : i32
    %c65535_i32_4 = arith.constant 65535 : i32
    %17 = arith.andi %16, %c65535_i32_4 : i32
    %18 = arith.xori %15, %17 : i32
    %c-2048144789_i32_5 = arith.constant -2048144789 : i32
    %19 = arith.muli %18, %c-2048144789_i32_5 : i32
    %c13_i32_6 = arith.constant 13 : i32
    %20 = arith.shrsi %19, %c13_i32_6 : i32
    %c524287_i32_7 = arith.constant 524287 : i32
    %21 = arith.andi %20, %c524287_i32_7 : i32
    %22 = arith.xori %19, %21 : i32
    %c-1028477387_i32_8 = arith.constant -1028477387 : i32
    %23 = arith.muli %22, %c-1028477387_i32_8 : i32
    %c16_i32_9 = arith.constant 16 : i32
    %24 = arith.shrsi %23, %c16_i32_9 : i32
    %c65535_i32_10 = arith.constant 65535 : i32
    %25 = arith.andi %24, %c65535_i32_10 : i32
    %26 = arith.xori %23, %25 : i32
    %27 = tpu.iota {dimensions = array<i32: 0>} : vector<2x1024xi32>
    %28 = tpu.iota {dimensions = array<i32: 1>} : vector<2x1024xi32>
    %c1024_i32 = arith.constant 1024 : i32
    %29 = vector.broadcast %c1024_i32 : i32 to vector<2x1024xi32>
    %30 = arith.muli %27, %29 : vector<2x1024xi32>
    %31 = vector.broadcast %0 : i32 to vector<2x1024xi32>
    %32 = arith.addi %31, %30 : vector<2x1024xi32>
    %33 = arith.addi %32, %28 : vector<2x1024xi32>
    %34 = vector.broadcast %13 : i32 to vector<2x1024xi32>
    %35 = arith.xori %33, %34 : vector<2x1024xi32>
    %c16_i32_11 = arith.constant 16 : i32
    %36 = vector.broadcast %c16_i32_11 : i32 to vector<2x1024xi32>
    %37 = arith.shrsi %35, %36 : vector<2x1024xi32>
    %c65535_i32_12 = arith.constant 65535 : i32
    %38 = vector.broadcast %c65535_i32_12 : i32 to vector<2x1024xi32>
    %39 = arith.andi %37, %38 : vector<2x1024xi32>
    %40 = arith.xori %35, %39 : vector<2x1024xi32>
    %c-2048144789_i32_13 = arith.constant -2048144789 : i32
    %41 = vector.broadcast %c-2048144789_i32_13 : i32 to vector<2x1024xi32>
    %42 = arith.muli %40, %41 : vector<2x1024xi32>
    %c13_i32_14 = arith.constant 13 : i32
    %43 = vector.broadcast %c13_i32_14 : i32 to vector<2x1024xi32>
    %44 = arith.shrsi %42, %43 : vector<2x1024xi32>
    %c524287_i32_15 = arith.constant 524287 : i32
    %45 = vector.broadcast %c524287_i32_15 : i32 to vector<2x1024xi32>
    %46 = arith.andi %44, %45 : vector<2x1024xi32>
    %47 = arith.xori %42, %46 : vector<2x1024xi32>
    %c-1028477387_i32_16 = arith.constant -1028477387 : i32
    %48 = vector.broadcast %c-1028477387_i32_16 : i32 to vector<2x1024xi32>
    %49 = arith.muli %47, %48 : vector<2x1024xi32>
    %c16_i32_17 = arith.constant 16 : i32
    %50 = vector.broadcast %c16_i32_17 : i32 to vector<2x1024xi32>
    %51 = arith.shrsi %49, %50 : vector<2x1024xi32>
    %c65535_i32_18 = arith.constant 65535 : i32
    %52 = vector.broadcast %c65535_i32_18 : i32 to vector<2x1024xi32>
    %53 = arith.andi %51, %52 : vector<2x1024xi32>
    %54 = arith.xori %49, %53 : vector<2x1024xi32>
    %c8_i32 = arith.constant 8 : i32
    %55 = vector.broadcast %c8_i32 : i32 to vector<2x1024xi32>
    %56 = arith.shrsi %54, %55 : vector<2x1024xi32>
    %c16777215_i32 = arith.constant 16777215 : i32
    %57 = vector.broadcast %c16777215_i32 : i32 to vector<2x1024xi32>
    %58 = arith.andi %56, %57 : vector<2x1024xi32>
    %59 = arith.sitofp %58 : vector<2x1024xi32> to vector<2x1024xf32>
    %cst = arith.constant 5.96046448E-8 : f32
    %60 = vector.broadcast %cst : f32 to vector<2x1024xf32>
    %61 = arith.mulf %59, %60 : vector<2x1024xf32>
    %62 = vector.broadcast %26 : i32 to vector<2x1024xi32>
    %63 = arith.xori %33, %62 : vector<2x1024xi32>
    %c16_i32_19 = arith.constant 16 : i32
    %64 = vector.broadcast %c16_i32_19 : i32 to vector<2x1024xi32>
    %65 = arith.shrsi %63, %64 : vector<2x1024xi32>
    %c65535_i32_20 = arith.constant 65535 : i32
    %66 = vector.broadcast %c65535_i32_20 : i32 to vector<2x1024xi32>
    %67 = arith.andi %65, %66 : vector<2x1024xi32>
    %68 = arith.xori %63, %67 : vector<2x1024xi32>
    %c-2048144789_i32_21 = arith.constant -2048144789 : i32
    %69 = vector.broadcast %c-2048144789_i32_21 : i32 to vector<2x1024xi32>
    %70 = arith.muli %68, %69 : vector<2x1024xi32>
    %c13_i32_22 = arith.constant 13 : i32
    %71 = vector.broadcast %c13_i32_22 : i32 to vector<2x1024xi32>
    %72 = arith.shrsi %70, %71 : vector<2x1024xi32>
    %c524287_i32_23 = arith.constant 524287 : i32
    %73 = vector.broadcast %c524287_i32_23 : i32 to vector<2x1024xi32>
    %74 = arith.andi %72, %73 : vector<2x1024xi32>
    %75 = arith.xori %70, %74 : vector<2x1024xi32>
    %c-1028477387_i32_24 = arith.constant -1028477387 : i32
    %76 = vector.broadcast %c-1028477387_i32_24 : i32 to vector<2x1024xi32>
    %77 = arith.muli %75, %76 : vector<2x1024xi32>
    %c16_i32_25 = arith.constant 16 : i32
    %78 = vector.broadcast %c16_i32_25 : i32 to vector<2x1024xi32>
    %79 = arith.shrsi %77, %78 : vector<2x1024xi32>
    %c65535_i32_26 = arith.constant 65535 : i32
    %80 = vector.broadcast %c65535_i32_26 : i32 to vector<2x1024xi32>
    %81 = arith.andi %79, %80 : vector<2x1024xi32>
    %82 = arith.xori %77, %81 : vector<2x1024xi32>
    %c8_i32_27 = arith.constant 8 : i32
    %83 = vector.broadcast %c8_i32_27 : i32 to vector<2x1024xi32>
    %84 = arith.shrsi %82, %83 : vector<2x1024xi32>
    %c16777215_i32_28 = arith.constant 16777215 : i32
    %85 = vector.broadcast %c16777215_i32_28 : i32 to vector<2x1024xi32>
    %86 = arith.andi %84, %85 : vector<2x1024xi32>
    %87 = arith.sitofp %86 : vector<2x1024xi32> to vector<2x1024xf32>
    %cst_29 = arith.constant 5.96046448E-8 : f32
    %88 = vector.broadcast %cst_29 : f32 to vector<2x1024xf32>
    %89 = arith.mulf %87, %88 : vector<2x1024xf32>
    %cst_30 = arith.constant 1.000000e+00 : f32
    %90 = vector.broadcast %cst_30 : f32 to vector<2x1024xf32>
    %91 = arith.subf %90, %61 : vector<2x1024xf32>
    %92 = math.log %91 : vector<2x1024xf32>
    %cst_31 = arith.constant -2.000000e+00 : f32
    %93 = vector.broadcast %cst_31 : f32 to vector<2x1024xf32>
    %94 = arith.mulf %93, %92 : vector<2x1024xf32>
    %95 = math.sqrt %94 : vector<2x1024xf32>
    %cst_32 = arith.constant 1.000000e-01 : f32
    %96 = vector.broadcast %cst_32 : f32 to vector<2x1024xf32>
    %97 = arith.mulf %96, %95 : vector<2x1024xf32>
    %cst_33 = arith.constant 6.28318548 : f32
    %98 = vector.broadcast %cst_33 : f32 to vector<2x1024xf32>
    %99 = arith.mulf %98, %89 : vector<2x1024xf32>
    %100 = math.cos %99 : vector<2x1024xf32>
    %101 = arith.mulf %97, %100 : vector<2x1024xf32>
    %c0_34 = arith.constant 0 : index
    %c0_35 = arith.constant 0 : index
    %102 = vector.load %arg2[%c0_34, %c0_35] : memref<2x1024xf32, #tpu.memory_space<vmem>>, vector<2x1024xf32>
    %103 = arith.addf %102, %101 : vector<2x1024xf32>
    %c0_36 = arith.constant 0 : index
    %c0_37 = arith.constant 0 : index
    %104 = vector.load %arg3[%c0_36, %c0_37] : memref<2x1024xf32, #tpu.memory_space<vmem>>, vector<2x1024xf32>
    tpu.vector_store %arg3[%c0_36, %c0_37], %103 {strides = array<i32>} : memref<2x1024xf32, #tpu.memory_space<vmem>>, vector<2x1024xf32>,
    return
  }
  func.func @transform_0(%arg0: i32, %arg1: memref<1xi32, #tpu.memory_space<smem>>) -> (i32, i32) {
    %c0_i32 = arith.constant 0 : i32
    %c0_i32_0 = arith.constant 0 : i32
    return %arg0, %c0_i32 : i32, i32
  }
  func.func @transform_1(%arg0: i32, %arg1: memref<1xi32, #tpu.memory_space<smem>>) -> (i32, i32) {
    %c0_i32 = arith.constant 0 : i32
    %c0_i32_0 = arith.constant 0 : i32
    return %arg0, %c0_i32 : i32, i32
  }
}

</mosaic_0001>

<llo_original>
// kernel: tpu_custom_call.1
$region0: #{tpu_custom_call.1}
  #allocation0 [shape = 'u32[]', space=smem, size = 0x4, offset = 0x4, fixed_abs, tag = 'smem constant byte address 0x4 - core index']
  #allocation1 [shape = 'u32[144,128]{1,0:T(1,128)}', space=vmem, size = 0x12000, scoped, tag = 'internal scratch']
  #allocation2 [shape = 's32[1]{0}', space=sflag, size = 0x4, scoped, tag = 'scoped memory for tpu_custom_call.1']
  #allocation3 [shape = 's32[1]{0:T(128)S(6)}', space=smem, size = 0x200, scoped, tag = 'prefetched SMEM operand 0']
  %s0 = inlined_call_operand.<no memory space> [shape: s32[1], index: 0, kind: input, shape index: {}]
  %s1 = inlined_call_operand.hbm [shape: f32[2,1024], index: 1, kind: input, shape index: {}]
  %s2 = inlined_call_operand.hbm [shape: f32[2,1024], index: 2, kind: output, shape index: {}]
  %s3 = sld [smem:[#allocation0]]
  $region18: #{tpu_custom_call.1} parent=0
    _
  %s5 = ssub.s32 1, %s3
  %s6 = scalar_select 0, %s5, %s3
  %7 = sst [smem:[#allocation3]] %s0
  $region1: #{tpu_custom_call.1} parent=0
    #allocation4 [shape = 'u8[8192]{0}', space=vmem, size = 0x2000, scoped, tag = 'input window, operand 1, single buffered']
    #allocation5 [shape = 's32[1]{0}', space=sflag, size = 0x4, scoped, tag = 'scoped memory for tpu_custom_call.1']
    #allocation6 [shape = 's32[1]{0}', space=sflag, size = 0x4, scoped, tag = 'scoped memory for tpu_custom_call.1']
    #allocation7 [shape = 'u8[8192]{0}', space=vmem, size = 0x2000, scoped, tag = 'output window, operand 0, single buffered']
    %8 = vsyncpa [#allocation5], 0
    %9 = vsyncpa [#allocation6], 0
    // Predicated region
    $region2: #{tpu_custom_call.1} parent=1 // pred_check
      _
    $region3: #{tpu_custom_call.1} parent=1 // pred_check_branch
      %11 = sbr.rel (0) target = $region5
    $region4: #{tpu_custom_call.1} parent=1 // pred_region
      %s13 = ssub.s32 256, 256
      %14 = vsyncadd [#allocation5], %s13
      %s16 = sshll.u32 [#allocation4], 4
      %s17 = int_to_ptr.vmem [resolvable:$true] %s16
      %19 = dma.hbm_to_vmem [thread:$0]  %s1, 256, %s17, [#allocation5]
    $region5: #{tpu_custom_call.1} parent=1 // pred_fallthru
      _
    // Predicated region
    $region6: #{tpu_custom_call.1} parent=1 // pred_check
      _
    $region7: #{tpu_custom_call.1} parent=1 // pred_check_branch
      %21 = sbr.rel (0) target = $region9
    $region8: #{tpu_custom_call.1} parent=1 // pred_region
      %22 = dma.done [#allocation5], 256
    $region9: #{tpu_custom_call.1} parent=1 // pred_fallthru
      _
    %s23 = smul.u32 0, 2048
    %s24 = sld [smem:[#allocation3]]
    %s25 = sxor.u32 %s24, 2654435769
    %s26 = sshra.s32 %s25, 16
    %s27 = sand.u32 %s26, 65535
    %s28 = sxor.u32 %s25, %s27
    %s29 = smul.u32 %s28, 2246822507
    %s30 = sshra.s32 %s29, 13
    %s31 = sand.u32 %s30, 524287
    %s32 = sxor.u32 %s29, %s31
    %s33 = smul.u32 %s32, 3266489909
    %s34 = sshra.s32 %s33, 16
    %s35 = sand.u32 %s34, 65535
    %s36 = sxor.u32 %s33, %s35
    %s37 = sxor.u32 %s24, 2135587861
    %s38 = sshra.s32 %s37, 16
    %s39 = sand.u32 %s38, 65535
    %s40 = sxor.u32 %s37, %s39
    %s41 = smul.u32 %s40, 2246822507
    %s42 = sshra.s32 %s41, 13
    %s43 = sand.u32 %s42, 524287
    %s44 = sxor.u32 %s41, %s43
    %s45 = smul.u32 %s44, 3266489909
    %s46 = sshra.s32 %s45, 16
    %s47 = sand.u32 %s46, 65535
    %s48 = sxor.u32 %s45, %s47
    %v49 = vlaneseq
    %v50 = vshrl.u32 %v49, 7
    %v51 = vlaneseq
    %v52 = vand.u32 %v51, 127
    %v53 = vadd.s32 %v52, 128
    %v54 = vadd.s32 %v52, 256
    %v55 = vadd.s32 %v52, 384
    %v56 = vadd.s32 %v52, 512
    %v57 = vadd.s32 %v52, 640
    %v58 = vadd.s32 %v52, 768
    %v59 = vadd.s32 %v52, 896
    %v60 = vmul.u32 %v50, 1024
    %v61 = vstv %s23
    %v62 = vadd.s32 %v61, %v60
    %v63 = vadd.s32 %v62, %v52
    %v64 = vadd.s32 %v62, %v53
    %v65 = vadd.s32 %v62, %v54
    %v66 = vadd.s32 %v62, %v55
    %v67 = vadd.s32 %v62, %v56
    %v68 = vadd.s32 %v62, %v57
    %v69 = vadd.s32 %v62, %v58
    %v70 = vadd.s32 %v62, %v59
    %v71 = vstv %s36
    %v72 = vxor.u32 %v63, %v71
    %v73 = vxor.u32 %v64, %v71
    %v74 = vxor.u32 %v65, %v71
    %v75 = vxor.u32 %v66, %v71
    %v76 = vxor.u32 %v67, %v71
    %v77 = vxor.u32 %v68, %v71
    %v78 = vxor.u32 %v69, %v71
    %v79 = vxor.u32 %v70, %v71
    %v80 = vshra.s32 %v72, 16
    %v81 = vshra.s32 %v73, 16
    %v82 = vshra.s32 %v74, 16
    %v83 = vshra.s32 %v75, 16
    %v84 = vshra.s32 %v76, 16
    %v85 = vshra.s32 %v77, 16
    %v86 = vshra.s32 %v78, 16
    %v87 = vshra.s32 %v79, 16
    %v88 = vand.u32 %v80, 65535
    %v89 = vand.u32 %v81, 65535
    %v90 = vand.u32 %v82, 65535
    %v91 = vand.u32 %v83, 65535
    %v92 = vand.u32 %v84, 65535
    %v93 = vand.u32 %v85, 65535
    %v94 = vand.u32 %v86, 65535
    %v95 = vand.u32 %v87, 65535
    %v96 = vxor.u32 %v72, %v88
    %v97 = vxor.u32 %v73, %v89
    %v98 = vxor.u32 %v74, %v90
    %v99 = vxor.u32 %v75, %v91
    %v100 = vxor.u32 %v76, %v92
    %v101 = vxor.u32 %v77, %v93
    %v102 = vxor.u32 %v78, %v94
    %v103 = vxor.u32 %v79, %v95
    %v104 = vmul.u32 %v96, 2246822507
    %v105 = vmul.u32 %v97, 2246822507
    %v106 = vmul.u32 %v98, 2246822507
    %v107 = vmul.u32 %v99, 2246822507
    %v108 = vmul.u32 %v100, 2246822507
    %v109 = vmul.u32 %v101, 2246822507
    %v110 = vmul.u32 %v102, 2246822507
    %v111 = vmul.u32 %v103, 2246822507
    %v112 = vshra.s32 %v104, 13
    %v113 = vshra.s32 %v105, 13
    %v114 = vshra.s32 %v106, 13
    %v115 = vshra.s32 %v107, 13
    %v116 = vshra.s32 %v108, 13
    %v117 = vshra.s32 %v109, 13
    %v118 = vshra.s32 %v110, 13
    %v119 = vshra.s32 %v111, 13
    %v120 = vand.u32 %v112, 524287
    %v121 = vand.u32 %v113, 524287
    %v122 = vand.u32 %v114, 524287
    %v123 = vand.u32 %v115, 524287
    %v124 = vand.u32 %v116, 524287
    %v125 = vand.u32 %v117, 524287
    %v126 = vand.u32 %v118, 524287
    %v127 = vand.u32 %v119, 524287
    %v128 = vxor.u32 %v104, %v120
    %v129 = vxor.u32 %v105, %v121
    %v130 = vxor.u32 %v106, %v122
    %v131 = vxor.u32 %v107, %v123
    %v132 = vxor.u32 %v108, %v124
    %v133 = vxor.u32 %v109, %v125
    %v134 = vxor.u32 %v110, %v126
    %v135 = vxor.u32 %v111, %v127
    %v136 = vmul.u32 %v128, 3266489909
    %v137 = vmul.u32 %v129, 3266489909
    %v138 = vmul.u32 %v130, 3266489909
    %v139 = vmul.u32 %v131, 3266489909
    %v140 = vmul.u32 %v132, 3266489909
    %v141 = vmul.u32 %v133, 3266489909
    %v142 = vmul.u32 %v134, 3266489909
    %v143 = vmul.u32 %v135, 3266489909
    %v144 = vshra.s32 %v136, 16
    %v145 = vshra.s32 %v137, 16
    %v146 = vshra.s32 %v138, 16
    %v147 = vshra.s32 %v139, 16
    %v148 = vshra.s32 %v140, 16
    %v149 = vshra.s32 %v141, 16
    %v150 = vshra.s32 %v142, 16
    %v151 = vshra.s32 %v143, 16
    %v152 = vand.u32 %v144, 65535
    %v153 = vand.u32 %v145, 65535
    %v154 = vand.u32 %v146, 65535
    %v155 = vand.u32 %v147, 65535
    %v156 = vand.u32 %v148, 65535
    %v157 = vand.u32 %v149, 65535
    %v158 = vand.u32 %v150, 65535
    %v159 = vand.u32 %v151, 65535
    %v160 = vxor.u32 %v136, %v152
    %v161 = vxor.u32 %v137, %v153
    %v162 = vxor.u32 %v138, %v154
    %v163 = vxor.u32 %v139, %v155
    %v164 = vxor.u32 %v140, %v156
    %v165 = vxor.u32 %v141, %v157
    %v166 = vxor.u32 %v142, %v158
    %v167 = vxor.u32 %v143, %v159
    %v168 = vshra.s32 %v160, 8
    %v169 = vshra.s32 %v161, 8
    %v170 = vshra.s32 %v162, 8
    %v171 = vshra.s32 %v163, 8
    %v172 = vshra.s32 %v164, 8
    %v173 = vshra.s32 %v165, 8
    %v174 = vshra.s32 %v166, 8
    %v175 = vshra.s32 %v167, 8
    %v176 = vand.u32 %v168, 16777215
    %v177 = vand.u32 %v169, 16777215
    %v178 = vand.u32 %v170, 16777215
    %v179 = vand.u32 %v171, 16777215
    %v180 = vand.u32 %v172, 16777215
    %v181 = vand.u32 %v173, 16777215
    %v182 = vand.u32 %v174, 16777215
    %v183 = vand.u32 %v175, 16777215
    %v184 = vcvt.s32.f32 %v176
    %v185 = vcvt.s32.f32 %v177
    %v186 = vcvt.s32.f32 %v178
    %v187 = vcvt.s32.f32 %v179
    %v188 = vcvt.s32.f32 %v180
    %v189 = vcvt.s32.f32 %v181
    %v190 = vcvt.s32.f32 %v182
    %v191 = vcvt.s32.f32 %v183
    %v192 = vmul.f32 %v184, 5.9604645e-08
    %v193 = vmul.f32 %v185, 5.9604645e-08
    %v194 = vmul.f32 %v186, 5.9604645e-08
    %v195 = vmul.f32 %v187, 5.9604645e-08
    %v196 = vmul.f32 %v188, 5.9604645e-08
    %v197 = vmul.f32 %v189, 5.9604645e-08
    %v198 = vmul.f32 %v190, 5.9604645e-08
    %v199 = vmul.f32 %v191, 5.9604645e-08
    %v200 = vstv %s48
    %v201 = vxor.u32 %v63, %v200
    %v202 = vxor.u32 %v64, %v200
    %v203 = vxor.u32 %v65, %v200
    %v204 = vxor.u32 %v66, %v200
    %v205 = vxor.u32 %v67, %v200
    %v206 = vxor.u32 %v68, %v200
    %v207 = vxor.u32 %v69, %v200
    %v208 = vxor.u32 %v70, %v200
    %v209 = vshra.s32 %v201, 16
    %v210 = vshra.s32 %v202, 16
    %v211 = vshra.s32 %v203, 16
    %v212 = vshra.s32 %v204, 16
    %v213 = vshra.s32 %v205, 16
    %v214 = vshra.s32 %v206, 16
    %v215 = vshra.s32 %v207, 16
    %v216 = vshra.s32 %v208, 16
    %v217 = vand.u32 %v209, 65535
    %v218 = vand.u32 %v210, 65535
    %v219 = vand.u32 %v211, 65535
    %v220 = vand.u32 %v212, 65535
    %v221 = vand.u32 %v213, 65535
    %v222 = vand.u32 %v214, 65535
    %v223 = vand.u32 %v215, 65535
    %v224 = vand.u32 %v216, 65535
    %v225 = vxor.u32 %v201, %v217
    %v226 = vxor.u32 %v202, %v218
    %v227 = vxor.u32 %v203, %v219
    %v228 = vxor.u32 %v204, %v220
    %v229 = vxor.u32 %v205, %v221
    %v230 = vxor.u32 %v206, %v222
    %v231 = vxor.u32 %v207, %v223
    %v232 = vxor.u32 %v208, %v224
    %v233 = vmul.u32 %v225, 2246822507
    %v234 = vmul.u32 %v226, 2246822507
    %v235 = vmul.u32 %v227, 2246822507
    %v236 = vmul.u32 %v228, 2246822507
    %v237 = vmul.u32 %v229, 2246822507
    %v238 = vmul.u32 %v230, 2246822507
    %v239 = vmul.u32 %v231, 2246822507
    %v240 = vmul.u32 %v232, 2246822507
    %v241 = vshra.s32 %v233, 13
    %v242 = vshra.s32 %v234, 13
    %v243 = vshra.s32 %v235, 13
    %v244 = vshra.s32 %v236, 13
    %v245 = vshra.s32 %v237, 13
    %v246 = vshra.s32 %v238, 13
    %v247 = vshra.s32 %v239, 13
    %v248 = vshra.s32 %v240, 13
    %v249 = vand.u32 %v241, 524287
    %v250 = vand.u32 %v242, 524287
    %v251 = vand.u32 %v243, 524287
    %v252 = vand.u32 %v244, 524287
    %v253 = vand.u32 %v245, 524287
    %v254 = vand.u32 %v246, 524287
    %v255 = vand.u32 %v247, 524287
    %v256 = vand.u32 %v248, 524287
    %v257 = vxor.u32 %v233, %v249
    %v258 = vxor.u32 %v234, %v250
    %v259 = vxor.u32 %v235, %v251
    %v260 = vxor.u32 %v236, %v252
    %v261 = vxor.u32 %v237, %v253
    %v262 = vxor.u32 %v238, %v254
    %v263 = vxor.u32 %v239, %v255
    %v264 = vxor.u32 %v240, %v256
    %v265 = vmul.u32 %v257, 3266489909
    %v266 = vmul.u32 %v258, 3266489909
    %v267 = vmul.u32 %v259, 3266489909
    %v268 = vmul.u32 %v260, 3266489909
    %v269 = vmul.u32 %v261, 3266489909
    %v270 = vmul.u32 %v262, 3266489909
    %v271 = vmul.u32 %v263, 3266489909
    %v272 = vmul.u32 %v264, 3266489909
    %v273 = vshra.s32 %v265, 16
    %v274 = vshra.s32 %v266, 16
    %v275 = vshra.s32 %v267, 16
    %v276 = vshra.s32 %v268, 16
    %v277 = vshra.s32 %v269, 16
    %v278 = vshra.s32 %v270, 16
    %v279 = vshra.s32 %v271, 16
    %v280 = vshra.s32 %v272, 16
    %v281 = vand.u32 %v273, 65535
    %v282 = vand.u32 %v274, 65535
    %v283 = vand.u32 %v275, 65535
    %v284 = vand.u32 %v276, 65535
    %v285 = vand.u32 %v277, 65535
    %v286 = vand.u32 %v278, 65535
    %v287 = vand.u32 %v279, 65535
    %v288 = vand.u32 %v280, 65535
    %v289 = vxor.u32 %v265, %v281
    %v290 = vxor.u32 %v266, %v282
    %v291 = vxor.u32 %v267, %v283
    %v292 = vxor.u32 %v268, %v284
    %v293 = vxor.u32 %v269, %v285
    %v294 = vxor.u32 %v270, %v286
    %v295 = vxor.u32 %v271, %v287
    %v296 = vxor.u32 %v272, %v288
    %v297 = vshra.s32 %v289, 8
    %v298 = vshra.s32 %v290, 8
    %v299 = vshra.s32 %v291, 8
    %v300 = vshra.s32 %v292, 8
    %v301 = vshra.s32 %v293, 8
    %v302 = vshra.s32 %v294, 8
    %v303 = vshra.s32 %v295, 8
    %v304 = vshra.s32 %v296, 8
    %v305 = vand.u32 %v297, 16777215
    %v306 = vand.u32 %v298, 16777215
    %v307 = vand.u32 %v299, 16777215
    %v308 = vand.u32 %v300, 16777215
    %v309 = vand.u32 %v301, 16777215
    %v310 = vand.u32 %v302, 16777215
    %v311 = vand.u32 %v303, 16777215
    %v312 = vand.u32 %v304, 16777215
    %v313 = vcvt.s32.f32 %v305
    %v314 = vcvt.s32.f32 %v306
    %v315 = vcvt.s32.f32 %v307
    %v316 = vcvt.s32.f32 %v308
    %v317 = vcvt.s32.f32 %v309
    %v318 = vcvt.s32.f32 %v310
    %v319 = vcvt.s32.f32 %v311
    %v320 = vcvt.s32.f32 %v312
    %v321 = vmul.f32 %v313, 5.9604645e-08
    %v322 = vmul.f32 %v314, 5.9604645e-08
    %v323 = vmul.f32 %v315, 5.9604645e-08
    %v324 = vmul.f32 %v316, 5.9604645e-08
    %v325 = vmul.f32 %v317, 5.9604645e-08
    %v326 = vmul.f32 %v318, 5.9604645e-08
    %v327 = vmul.f32 %v319, 5.9604645e-08
    %v328 = vmul.f32 %v320, 5.9604645e-08
    %v329 = vsub.f32 1.0, %v192
    %v330 = vsub.f32 1.0, %v193
    %v331 = vsub.f32 1.0, %v194
    %v332 = vsub.f32 1.0, %v195
    %v333 = vsub.f32 1.0, %v196
    %v334 = vsub.f32 1.0, %v197
    %v335 = vsub.f32 1.0, %v198
    %v336 = vsub.f32 1.0, %v199
    %v337 = vlog2.pop %v329
    %v338 = vmul.f32 %v337, 0.6931472
    %v339 = vlog2.pop %v330
    %v340 = vmul.f32 %v339, 0.6931472
    %v341 = vlog2.pop %v331
    %v342 = vmul.f32 %v341, 0.6931472
    %v343 = vlog2.pop %v332
    %v344 = vmul.f32 %v343, 0.6931472
    %v345 = vlog2.pop %v333
    %v346 = vmul.f32 %v345, 0.6931472
    %v347 = vlog2.pop %v334
    %v348 = vmul.f32 %v347, 0.6931472
    %v349 = vlog2.pop %v335
    %v350 = vmul.f32 %v349, 0.6931472
    %v351 = vlog2.pop %v336
    %v352 = vmul.f32 %v351, 0.6931472
    %v353 = vmul.f32 %v338, -2.0
    %v354 = vmul.f32 %v340, -2.0
    %v355 = vmul.f32 %v342, -2.0
    %v356 = vmul.f32 %v344, -2.0
    %v357 = vmul.f32 %v346, -2.0
    %v358 = vmul.f32 %v348, -2.0
    %v359 = vmul.f32 %v350, -2.0
    %v360 = vmul.f32 %v352, -2.0
    %v361 = vrsqrt.pop %v353
    %v362 = vmul.f32 %v353, %v361
    %vm363 = vcmp.eq.f32.partialorder %v353, inf
    %v364 = vsel %vm363, %v353, %v362
    %vm365 = vcmp.eq.f32.partialorder %v353, 0.0
    %v366 = vand.u32 %v353, 2147483648
    %v367 = vsel %vm365, %v366, %v364
    %v368 = vrsqrt.pop %v354
    %v369 = vmul.f32 %v354, %v368
    %vm370 = vcmp.eq.f32.partialorder %v354, inf
    %v371 = vsel %vm370, %v354, %v369
    %vm372 = vcmp.eq.f32.partialorder %v354, 0.0
    %v373 = vand.u32 %v354, 2147483648
    %v374 = vsel %vm372, %v373, %v371
    %v375 = vrsqrt.pop %v355
    %v376 = vmul.f32 %v355, %v375
    %vm377 = vcmp.eq.f32.partialorder %v355, inf
    %v378 = vsel %vm377, %v355, %v376
    %vm379 = vcmp.eq.f32.partialorder %v355, 0.0
    %v380 = vand.u32 %v355, 2147483648
    %v381 = vsel %vm379, %v380, %v378
    %v382 = vrsqrt.pop %v356
    %v383 = vmul.f32 %v356, %v382
    %vm384 = vcmp.eq.f32.partialorder %v356, inf
    %v385 = vsel %vm384, %v356, %v383
    %vm386 = vcmp.eq.f32.partialorder %v356, 0.0
    %v387 = vand.u32 %v356, 2147483648
    %v388 = vsel %vm386, %v387, %v385
    %v389 = vrsqrt.pop %v357
    %v390 = vmul.f32 %v357, %v389
    %vm391 = vcmp.eq.f32.partialorder %v357, inf
    %v392 = vsel %vm391, %v357, %v390
    %vm393 = vcmp.eq.f32.partialorder %v357, 0.0
    %v394 = vand.u32 %v357, 2147483648
    %v395 = vsel %vm393, %v394, %v392
    %v396 = vrsqrt.pop %v358
    %v397 = vmul.f32 %v358, %v396
    %vm398 = vcmp.eq.f32.partialorder %v358, inf
    %v399 = vsel %vm398, %v358, %v397
    %vm400 = vcmp.eq.f32.partialorder %v358, 0.0
    %v401 = vand.u32 %v358, 2147483648
    %v402 = vsel %vm400, %v401, %v399
    %v403 = vrsqrt.pop %v359
    %v404 = vmul.f32 %v359, %v403
    %vm405 = vcmp.eq.f32.partialorder %v359, inf
    %v406 = vsel %vm405, %v359, %v404
    %vm407 = vcmp.eq.f32.partialorder %v359, 0.0
    %v408 = vand.u32 %v359, 2147483648
    %v409 = vsel %vm407, %v408, %v406
    %v410 = vrsqrt.pop %v360
    %v411 = vmul.f32 %v360, %v410
    %vm412 = vcmp.eq.f32.partialorder %v360, inf
    %v413 = vsel %vm412, %v360, %v411
    %vm414 = vcmp.eq.f32.partialorder %v360, 0.0
    %v415 = vand.u32 %v360, 2147483648
    %v416 = vsel %vm414, %v415, %v413
    %v417 = vmul.f32 %v367, 0.1
    %v418 = vmul.f32 %v374, 0.1
    %v419 = vmul.f32 %v381, 0.1
    %v420 = vmul.f32 %v388, 0.1
    %v421 = vmul.f32 %v395, 0.1
    %v422 = vmul.f32 %v402, 0.1
    %v423 = vmul.f32 %v409, 0.1
    %v424 = vmul.f32 %v416, 0.1
    %v425 = vmul.f32 %v321, 6.2831855
    %v426 = vmul.f32 %v322, 6.2831855
    %v427 = vmul.f32 %v323, 6.2831855
    %v428 = vmul.f32 %v324, 6.2831855
    %v429 = vmul.f32 %v325, 6.2831855
    %v430 = vmul.f32 %v326, 6.2831855
    %v431 = vmul.f32 %v327, 6.2831855
    %v432 = vmul.f32 %v328, 6.2831855
    %v433 = vand.u32 2147483647, %v425
    %vm434 = vcmp.le.f32.partialorder %v433, 0.7853982
    %vm435 = vcmp.lt.s32.totalorder %v425, 0
    %v436 = vand.u32 %v425, 2139095040
    %v437 = vshrl.u32 %v436, 23
    %v438 = vsub.s32 %v437, 127
    %v439 = vand.u32 2147483647, %v425
    %v440 = vand.u32 %v439, 8388607
    %v441 = vor.u32 %v440, 8388608
    %v442 = vsub.s32 0, %v441
    %v443 = vadd.s32 %v438, 1
    %vm444 = vcmp.gt.s32.totalorder %v443, 0
    %v445 = vsel %vm444, %v443, 0
    %v446 = vshrl.u32 %v445, 5
    %v447 = vand.u32 %v445, 31
    %v448 = vsub.s32 32, %v447
    %v449 = vshrl.u32 683565275, %v448
    %v450 = vshll.u32 683565275, %v447
    %v451 = vshrl.u32 2475754826, %v448
    %v452 = vor.u32 %v450, %v451
    %v453 = vshll.u32 2475754826, %v447
    %v454 = vshrl.u32 2131351028, %v448
    %v455 = vor.u32 %v453, %v454
    %v456 = vshll.u32 2131351028, %v447
    %v457 = vshrl.u32 2102212464, %v448
    %v458 = vor.u32 %v456, %v457
    %v459 = vshll.u32 2102212464, %v447
    %v460 = vshrl.u32 920167782, %v448
    %v461 = vor.u32 %v459, %v460
    %v462 = vshll.u32 920167782, %v447
    %v463 = vshrl.u32 1326507024, %v448
    %v464 = vor.u32 %v462, %v463
    %vm465 = vcmp.lt.s32.totalorder %v446, 1
    %vm466 = vcmp.lt.s32.totalorder %v446, 2
    %vm467 = vcmp.lt.s32.totalorder %v446, 3
    %vm468 = vcmp.lt.s32.totalorder %v446, 4
    %v469 = vsel %vm465, %v449, %v452
    %v470 = vsel %vm468, %v458, 2102212464
    %v471 = vsel %vm467, %v455, %v470
    %v472 = vsel %vm466, %v469, %v471
    %v473 = vsel %vm465, %v452, %v455
    %v474 = vsel %vm468, %v461, 920167782
    %v475 = vsel %vm467, %v458, %v474
    %v476 = vsel %vm466, %v473, %v475
    %v477 = vsel %vm465, %v455, %v458
    %v478 = vsel %vm468, %v464, 1326507024
    %v479 = vsel %vm467, %v461, %v478
    %v480 = vsel %vm466, %v477, %v479
    %v481 = vshll.u32 %v441, 8
    %v482 = vmul.u32.u64.compose %v481, %v480
    %v483 = vextract.low.u32 %v482
    %v484 = vextract.high.u32 %v482
    %v485 = vmul.u32.u64.compose %v481, %v476
    %v486 = vextract.low.u32 %v485
    %v487 = vextract.high.u32 %v485
    %v488 = vmul.u32 %v481, %v472
    %v489 = vadd.s32 %v484, %v486
    %vm490 = vc.u32 %v484, %v486
    %v491 = vadd.s32 %v487, 1
    %v492 = vsel %vm490, %v491, %v487
    %v493 = vadd.s32 %v488, %v492
    %v494 = vadd.s32 %v493, 536870912
    %v495 = vshrl.u32 %v494, 30
    %v496 = vshll.u32 %v495, 30
    %v497 = vsub.s32 %v493, %v496
    %vm498 = vcmp.lt.s32.totalorder %v497, 0
    %v499 = vsub.s32 0, %v497
    %v500 = vsel %vm498, %v499, %v497
    %v501 = vclz %v500
    %v502 = vsub.s32 %v501, 2
    %vm503 = vcmp.gt.s32.totalorder 0, %v502
    %v504 = vsel %vm503, 0, %v502
    %v505 = vsub.s32 32, %v504
    %v506 = vshll.u32 %v497, %v504
    %v507 = vshrl.u32 %v489, %v505
    %v508 = vor.u32 %v506, %v507
    %v509 = vsub.s32 4294967266, %v504
    %v510 = vadd.s32 %v509, 127
    %v511 = vshll.u32 %v510, 23
    %v512 = vor.u32 4788187, %v511
    %v513 = vand.u32 2147483647, %v512
    %v515 = vcvt.s32.f32 %v508
    %v516 = vmul.f32 %v515, %v513
    %v517 = vxor.u32 %v516, 2147483648
    %v518 = vsel %vm435, %v517, %v516
    %v519 = vsub.s32 4, %v495
    %v520 = vsel %vm435, %v519, %v495
    %v521 = vsel %vm434, %v425, %v518
    %v522 = vsel %vm434, 0, %v520
    %v523 = vcosq.f32.pop %v521
    %v524 = vsinq.f32.pop %v521
    %vm525 = vweird.f32 %v425
    %v526 = vand.u32 %v522, 3
    %vm527 = vcmp.lt.s32.totalorder %v526, 2
    %vm528 = vcmp.eq.s32.totalorder %v526, 0
    %v529 = vxor.u32 %v524, 2147483648
    %v530 = vsel %vm528, %v523, %v529
    %vm531 = vcmp.eq.s32.totalorder %v526, 2
    %v532 = vxor.u32 %v523, 2147483648
    %v533 = vsel %vm531, %v532, %v524
    %v534 = vsel %vm527, %v530, %v533
    %v535 = vsel %vm525, nan, %v534
    %v536 = vand.u32 2147483647, %v426
    %vm537 = vcmp.le.f32.partialorder %v536, 0.7853982
    %vm538 = vcmp.lt.s32.totalorder %v426, 0
    %v539 = vand.u32 %v426, 2139095040
    %v540 = vshrl.u32 %v539, 23
    %v541 = vsub.s32 %v540, 127
    %v542 = vand.u32 2147483647, %v426
    %v543 = vand.u32 %v542, 8388607
    %v544 = vor.u32 %v543, 8388608
    %v545 = vsub.s32 0, %v544
    %v546 = vadd.s32 %v541, 1
    %vm547 = vcmp.gt.s32.totalorder %v546, 0
    %v548 = vsel %vm547, %v546, 0
    %v549 = vshrl.u32 %v548, 5
    %v550 = vand.u32 %v548, 31
    %v551 = vsub.s32 32, %v550
    %v552 = vshrl.u32 683565275, %v551
    %v553 = vshll.u32 683565275, %v550
    %v554 = vshrl.u32 2475754826, %v551
    %v555 = vor.u32 %v553, %v554
    %v556 = vshll.u32 2475754826, %v550
    %v557 = vshrl.u32 2131351028, %v551
    %v558 = vor.u32 %v556, %v557
    %v559 = vshll.u32 2131351028, %v550
    %v560 = vshrl.u32 2102212464, %v551
    %v561 = vor.u32 %v559, %v560
    %v562 = vshll.u32 2102212464, %v550
    %v563 = vshrl.u32 920167782, %v551
    %v564 = vor.u32 %v562, %v563
    %v565 = vshll.u32 920167782, %v550
    %v566 = vshrl.u32 1326507024, %v551
    %v567 = vor.u32 %v565, %v566
    %vm568 = vcmp.lt.s32.totalorder %v549, 1
    %vm569 = vcmp.lt.s32.totalorder %v549, 2
    %vm570 = vcmp.lt.s32.totalorder %v549, 3
    %vm571 = vcmp.lt.s32.totalorder %v549, 4
    %v572 = vsel %vm568, %v552, %v555
    %v573 = vsel %vm571, %v561, 2102212464
    %v574 = vsel %vm570, %v558, %v573
    %v575 = vsel %vm569, %v572, %v574
    %v576 = vsel %vm568, %v555, %v558
    %v577 = vsel %vm571, %v564, 920167782
    %v578 = vsel %vm570, %v561, %v577
    %v579 = vsel %vm569, %v576, %v578
    %v580 = vsel %vm568, %v558, %v561
    %v581 = vsel %vm571, %v567, 1326507024
    %v582 = vsel %vm570, %v564, %v581
    %v583 = vsel %vm569, %v580, %v582
    %v584 = vshll.u32 %v544, 8
    %v585 = vmul.u32.u64.compose %v584, %v583
    %v586 = vextract.low.u32 %v585
    %v587 = vextract.high.u32 %v585
    %v588 = vmul.u32.u64.compose %v584, %v579
    %v589 = vextract.low.u32 %v588
    %v590 = vextract.high.u32 %v588
    %v591 = vmul.u32 %v584, %v575
    %v592 = vadd.s32 %v587, %v589
    %vm593 = vc.u32 %v587, %v589
    %v594 = vadd.s32 %v590, 1
    %v595 = vsel %vm593, %v594, %v590
    %v596 = vadd.s32 %v591, %v595
    %v597 = vadd.s32 %v596, 536870912
    %v598 = vshrl.u32 %v597, 30
    %v599 = vshll.u32 %v598, 30
    %v600 = vsub.s32 %v596, %v599
    %vm601 = vcmp.lt.s32.totalorder %v600, 0
    %v602 = vsub.s32 0, %v600
    %v603 = vsel %vm601, %v602, %v600
    %v604 = vclz %v603
    %v605 = vsub.s32 %v604, 2
    %vm606 = vcmp.gt.s32.totalorder 0, %v605
    %v607 = vsel %vm606, 0, %v605
    %v608 = vsub.s32 32, %v607
    %v609 = vshll.u32 %v600, %v607
    %v610 = vshrl.u32 %v592, %v608
    %v611 = vor.u32 %v609, %v610
    %v612 = vsub.s32 4294967266, %v607
    %v613 = vadd.s32 %v612, 127
    %v614 = vshll.u32 %v613, 23
    %v615 = vor.u32 4788187, %v614
    %v616 = vand.u32 2147483647, %v615
    %v618 = vcvt.s32.f32 %v611
    %v619 = vmul.f32 %v618, %v616
    %v620 = vxor.u32 %v619, 2147483648
    %v621 = vsel %vm538, %v620, %v619
    %v622 = vsub.s32 4, %v598
    %v623 = vsel %vm538, %v622, %v598
    %v624 = vsel %vm537, %v426, %v621
    %v625 = vsel %vm537, 0, %v623
    %v626 = vcosq.f32.pop %v624
    %v627 = vsinq.f32.pop %v624
    %vm628 = vweird.f32 %v426
    %v629 = vand.u32 %v625, 3
    %vm630 = vcmp.lt.s32.totalorder %v629, 2
    %vm631 = vcmp.eq.s32.totalorder %v629, 0
    %v632 = vxor.u32 %v627, 2147483648
    %v633 = vsel %vm631, %v626, %v632
    %vm634 = vcmp.eq.s32.totalorder %v629, 2
    %v635 = vxor.u32 %v626, 2147483648
    %v636 = vsel %vm634, %v635, %v627
    %v637 = vsel %vm630, %v633, %v636
    %v638 = vsel %vm628, nan, %v637
    %v639 = vand.u32 2147483647, %v427
    %vm640 = vcmp.le.f32.partialorder %v639, 0.7853982
    %vm641 = vcmp.lt.s32.totalorder %v427, 0
    %v642 = vand.u32 %v427, 2139095040
    %v643 = vshrl.u32 %v642, 23
    %v644 = vsub.s32 %v643, 127
    %v645 = vand.u32 2147483647, %v427
    %v646 = vand.u32 %v645, 8388607
    %v647 = vor.u32 %v646, 8388608
    %v648 = vsub.s32 0, %v647
    %v649 = vadd.s32 %v644, 1
    %vm650 = vcmp.gt.s32.totalorder %v649, 0
    %v651 = vsel %vm650, %v649, 0
    %v652 = vshrl.u32 %v651, 5
    %v653 = vand.u32 %v651, 31
    %v654 = vsub.s32 32, %v653
    %v655 = vshrl.u32 683565275, %v654
    %v656 = vshll.u32 683565275, %v653
    %v657 = vshrl.u32 2475754826, %v654
    %v658 = vor.u32 %v656, %v657
    %v659 = vshll.u32 2475754826, %v653
    %v660 = vshrl.u32 2131351028, %v654
    %v661 = vor.u32 %v659, %v660
    %v662 = vshll.u32 2131351028, %v653
    %v663 = vshrl.u32 2102212464, %v654
    %v664 = vor.u32 %v662, %v663
    %v665 = vshll.u32 2102212464, %v653
    %v666 = vshrl.u32 920167782, %v654
    %v667 = vor.u32 %v665, %v666
    %v668 = vshll.u32 920167782, %v653
    %v669 = vshrl.u32 1326507024, %v654
    %v670 = vor.u32 %v668, %v669
    %vm671 = vcmp.lt.s32.totalorder %v652, 1
    %vm672 = vcmp.lt.s32.totalorder %v652, 2
    %vm673 = vcmp.lt.s32.totalorder %v652, 3
    %vm674 = vcmp.lt.s32.totalorder %v652, 4
    %v675 = vsel %vm671, %v655, %v658
    %v676 = vsel %vm674, %v664, 2102212464
    %v677 = vsel %vm673, %v661, %v676
    %v678 = vsel %vm672, %v675, %v677
    %v679 = vsel %vm671, %v658, %v661
    %v680 = vsel %vm674, %v667, 920167782
    %v681 = vsel %vm673, %v664, %v680
    %v682 = vsel %vm672, %v679, %v681
    %v683 = vsel %vm671, %v661, %v664
    %v684 = vsel %vm674, %v670, 1326507024
    %v685 = vsel %vm673, %v667, %v684
    %v686 = vsel %vm672, %v683, %v685
    %v687 = vshll.u32 %v647, 8
    %v688 = vmul.u32.u64.compose %v687, %v686
    %v689 = vextract.low.u32 %v688
    %v690 = vextract.high.u32 %v688
    %v691 = vmul.u32.u64.compose %v687, %v682
    %v692 = vextract.low.u32 %v691
    %v693 = vextract.high.u32 %v691
    %v694 = vmul.u32 %v687, %v678
    %v695 = vadd.s32 %v690, %v692
    %vm696 = vc.u32 %v690, %v692
    %v697 = vadd.s32 %v693, 1
    %v698 = vsel %vm696, %v697, %v693
    %v699 = vadd.s32 %v694, %v698
    %v700 = vadd.s32 %v699, 536870912
    %v701 = vshrl.u32 %v700, 30
    %v702 = vshll.u32 %v701, 30
    %v703 = vsub.s32 %v699, %v702
    %vm704 = vcmp.lt.s32.totalorder %v703, 0
    %v705 = vsub.s32 0, %v703
    %v706 = vsel %vm704, %v705, %v703
    %v707 = vclz %v706
    %v708 = vsub.s32 %v707, 2
    %vm709 = vcmp.gt.s32.totalorder 0, %v708
    %v710 = vsel %vm709, 0, %v708
    %v711 = vsub.s32 32, %v710
    %v712 = vshll.u32 %v703, %v710
    %v713 = vshrl.u32 %v695, %v711
    %v714 = vor.u32 %v712, %v713
    %v715 = vsub.s32 4294967266, %v710
    %v716 = vadd.s32 %v715, 127
    %v717 = vshll.u32 %v716, 23
    %v718 = vor.u32 4788187, %v717
    %v719 = vand.u32 2147483647, %v718
    %v721 = vcvt.s32.f32 %v714
    %v722 = vmul.f32 %v721, %v719
    %v723 = vxor.u32 %v722, 2147483648
    %v724 = vsel %vm641, %v723, %v722
    %v725 = vsub.s32 4, %v701
    %v726 = vsel %vm641, %v725, %v701
    %v727 = vsel %vm640, %v427, %v724
    %v728 = vsel %vm640, 0, %v726
    %v729 = vcosq.f32.pop %v727
    %v730 = vsinq.f32.pop %v727
    %vm731 = vweird.f32 %v427
    %v732 = vand.u32 %v728, 3
    %vm733 = vcmp.lt.s32.totalorder %v732, 2
    %vm734 = vcmp.eq.s32.totalorder %v732, 0
    %v735 = vxor.u32 %v730, 2147483648
    %v736 = vsel %vm734, %v729, %v735
    %vm737 = vcmp.eq.s32.totalorder %v732, 2
    %v738 = vxor.u32 %v729, 2147483648
    %v739 = vsel %vm737, %v738, %v730
    %v740 = vsel %vm733, %v736, %v739
    %v741 = vsel %vm731, nan, %v740
    %v742 = vand.u32 2147483647, %v428
    %vm743 = vcmp.le.f32.partialorder %v742, 0.7853982
    %vm744 = vcmp.lt.s32.totalorder %v428, 0
    %v745 = vand.u32 %v428, 2139095040
    %v746 = vshrl.u32 %v745, 23
    %v747 = vsub.s32 %v746, 127
    %v748 = vand.u32 2147483647, %v428
    %v749 = vand.u32 %v748, 8388607
    %v750 = vor.u32 %v749, 8388608
    %v751 = vsub.s32 0, %v750
    %v752 = vadd.s32 %v747, 1
    %vm753 = vcmp.gt.s32.totalorder %v752, 0
    %v754 = vsel %vm753, %v752, 0
    %v755 = vshrl.u32 %v754, 5
    %v756 = vand.u32 %v754, 31
    %v757 = vsub.s32 32, %v756
    %v758 = vshrl.u32 683565275, %v757
    %v759 = vshll.u32 683565275, %v756
    %v760 = vshrl.u32 2475754826, %v757
    %v761 = vor.u32 %v759, %v760
    %v762 = vshll.u32 2475754826, %v756
    %v763 = vshrl.u32 2131351028, %v757
    %v764 = vor.u32 %v762, %v763
    %v765 = vshll.u32 2131351028, %v756
    %v766 = vshrl.u32 2102212464, %v757
    %v767 = vor.u32 %v765, %v766
    %v768 = vshll.u32 2102212464, %v756
    %v769 = vshrl.u32 920167782, %v757
    %v770 = vor.u32 %v768, %v769
    %v771 = vshll.u32 920167782, %v756
    %v772 = vshrl.u32 1326507024, %v757
    %v773 = vor.u32 %v771, %v772
    %vm774 = vcmp.lt.s32.totalorder %v755, 1
    %vm775 = vcmp.lt.s32.totalorder %v755, 2
    %vm776 = vcmp.lt.s32.totalorder %v755, 3
    %vm777 = vcmp.lt.s32.totalorder %v755, 4
    %v778 = vsel %vm774, %v758, %v761
    %v779 = vsel %vm777, %v767, 2102212464
    %v780 = vsel %vm776, %v764, %v779
    %v781 = vsel %vm775, %v778, %v780
    %v782 = vsel %vm774, %v761, %v764
    %v783 = vsel %vm777, %v770, 920167782
    %v784 = vsel %vm776, %v767, %v783
    %v785 = vsel %vm775, %v782, %v784
    %v786 = vsel %vm774, %v764, %v767
    %v787 = vsel %vm777, %v773, 1326507024
    %v788 = vsel %vm776, %v770, %v787
    %v789 = vsel %vm775, %v786, %v788
    %v790 = vshll.u32 %v750, 8
    %v791 = vmul.u32.u64.compose %v790, %v789
    %v792 = vextract.low.u32 %v791
    %v793 = vextract.high.u32 %v791
    %v794 = vmul.u32.u64.compose %v790, %v785
    %v795 = vextract.low.u32 %v794
    %v796 = vextract.high.u32 %v794
    %v797 = vmul.u32 %v790, %v781
    %v798 = vadd.s32 %v793, %v795
    %vm799 = vc.u32 %v793, %v795
    %v800 = vadd.s32 %v796, 1
    %v801 = vsel %vm799, %v800, %v796
    %v802 = vadd.s32 %v797, %v801
    %v803 = vadd.s32 %v802, 536870912
    %v804 = vshrl.u32 %v803, 30
    %v805 = vshll.u32 %v804, 30
    %v806 = vsub.s32 %v802, %v805
    %vm807 = vcmp.lt.s32.totalorder %v806, 0
    %v808 = vsub.s32 0, %v806
    %v809 = vsel %vm807, %v808, %v806
    %v810 = vclz %v809
    %v811 = vsub.s32 %v810, 2
    %vm812 = vcmp.gt.s32.totalorder 0, %v811
    %v813 = vsel %vm812, 0, %v811
    %v814 = vsub.s32 32, %v813
    %v815 = vshll.u32 %v806, %v813
    %v816 = vshrl.u32 %v798, %v814
    %v817 = vor.u32 %v815, %v816
    %v818 = vsub.s32 4294967266, %v813
    %v819 = vadd.s32 %v818, 127
    %v820 = vshll.u32 %v819, 23
    %v821 = vor.u32 4788187, %v820
    %v822 = vand.u32 2147483647, %v821
    %v824 = vcvt.s32.f32 %v817
    %v825 = vmul.f32 %v824, %v822
    %v826 = vxor.u32 %v825, 2147483648
    %v827 = vsel %vm744, %v826, %v825
    %v828 = vsub.s32 4, %v804
    %v829 = vsel %vm744, %v828, %v804
    %v830 = vsel %vm743, %v428, %v827
    %v831 = vsel %vm743, 0, %v829
    %v832 = vcosq.f32.pop %v830
    %v833 = vsinq.f32.pop %v830
    %vm834 = vweird.f32 %v428
    %v835 = vand.u32 %v831, 3
    %vm836 = vcmp.lt.s32.totalorder %v835, 2
    %vm837 = vcmp.eq.s32.totalorder %v835, 0
    %v838 = vxor.u32 %v833, 2147483648
    %v839 = vsel %vm837, %v832, %v838
    %vm840 = vcmp.eq.s32.totalorder %v835, 2
    %v841 = vxor.u32 %v832, 2147483648
    %v842 = vsel %vm840, %v841, %v833
    %v843 = vsel %vm836, %v839, %v842
    %v844 = vsel %vm834, nan, %v843
    %v845 = vand.u32 2147483647, %v429
    %vm846 = vcmp.le.f32.partialorder %v845, 0.7853982
    %vm847 = vcmp.lt.s32.totalorder %v429, 0
    %v848 = vand.u32 %v429, 2139095040
    %v849 = vshrl.u32 %v848, 23
    %v850 = vsub.s32 %v849, 127
    %v851 = vand.u32 2147483647, %v429
    %v852 = vand.u32 %v851, 8388607
    %v853 = vor.u32 %v852, 8388608
    %v854 = vsub.s32 0, %v853
    %v855 = vadd.s32 %v850, 1
    %vm856 = vcmp.gt.s32.totalorder %v855, 0
    %v857 = vsel %vm856, %v855, 0
    %v858 = vshrl.u32 %v857, 5
    %v859 = vand.u32 %v857, 31
    %v860 = vsub.s32 32, %v859
    %v861 = vshrl.u32 683565275, %v860
    %v862 = vshll.u32 683565275, %v859
    %v863 = vshrl.u32 2475754826, %v860
    %v864 = vor.u32 %v862, %v863
    %v865 = vshll.u32 2475754826, %v859
    %v866 = vshrl.u32 2131351028, %v860
    %v867 = vor.u32 %v865, %v866
    %v868 = vshll.u32 2131351028, %v859
    %v869 = vshrl.u32 2102212464, %v860
    %v870 = vor.u32 %v868, %v869
    %v871 = vshll.u32 2102212464, %v859
    %v872 = vshrl.u32 920167782, %v860
    %v873 = vor.u32 %v871, %v872
    %v874 = vshll.u32 920167782, %v859
    %v875 = vshrl.u32 1326507024, %v860
    %v876 = vor.u32 %v874, %v875
    %vm877 = vcmp.lt.s32.totalorder %v858, 1
    %vm878 = vcmp.lt.s32.totalorder %v858, 2
    %vm879 = vcmp.lt.s32.totalorder %v858, 3
    %vm880 = vcmp.lt.s32.totalorder %v858, 4
    %v881 = vsel %vm877, %v861, %v864
    %v882 = vsel %vm880, %v870, 2102212464
    %v883 = vsel %vm879, %v867, %v882
    %v884 = vsel %vm878, %v881, %v883
    %v885 = vsel %vm877, %v864, %v867
    %v886 = vsel %vm880, %v873, 920167782
    %v887 = vsel %vm879, %v870, %v886
    %v888 = vsel %vm878, %v885, %v887
    %v889 = vsel %vm877, %v867, %v870
    %v890 = vsel %vm880, %v876, 1326507024
    %v891 = vsel %vm879, %v873, %v890
    %v892 = vsel %vm878, %v889, %v891
    %v893 = vshll.u32 %v853, 8
    %v894 = vmul.u32.u64.compose %v893, %v892
    %v895 = vextract.low.u32 %v894
    %v896 = vextract.high.u32 %v894
    %v897 = vmul.u32.u64.compose %v893, %v888
    %v898 = vextract.low.u32 %v897
    %v899 = vextract.high.u32 %v897
    %v900 = vmul.u32 %v893, %v884
    %v901 = vadd.s32 %v896, %v898
    %vm902 = vc.u32 %v896, %v898
    %v903 = vadd.s32 %v899, 1
    %v904 = vsel %vm902, %v903, %v899
    %v905 = vadd.s32 %v900, %v904
    %v906 = vadd.s32 %v905, 536870912
    %v907 = vshrl.u32 %v906, 30
    %v908 = vshll.u32 %v907, 30
    %v909 = vsub.s32 %v905, %v908
    %vm910 = vcmp.lt.s32.totalorder %v909, 0
    %v911 = vsub.s32 0, %v909
    %v912 = vsel %vm910, %v911, %v909
    %v913 = vclz %v912
    %v914 = vsub.s32 %v913, 2
    %vm915 = vcmp.gt.s32.totalorder 0, %v914
    %v916 = vsel %vm915, 0, %v914
    %v917 = vsub.s32 32, %v916
    %v918 = vshll.u32 %v909, %v916
    %v919 = vshrl.u32 %v901, %v917
    %v920 = vor.u32 %v918, %v919
    %v921 = vsub.s32 4294967266, %v916
    %v922 = vadd.s32 %v921, 127
    %v923 = vshll.u32 %v922, 23
    %v924 = vor.u32 4788187, %v923
    %v925 = vand.u32 2147483647, %v924
    %v927 = vcvt.s32.f32 %v920
    %v928 = vmul.f32 %v927, %v925
    %v929 = vxor.u32 %v928, 2147483648
    %v930 = vsel %vm847, %v929, %v928
    %v931 = vsub.s32 4, %v907
    %v932 = vsel %vm847, %v931, %v907
    %v933 = vsel %vm846, %v429, %v930
    %v934 = vsel %vm846, 0, %v932
    %v935 = vcosq.f32.pop %v933
    %v936 = vsinq.f32.pop %v933
    %vm937 = vweird.f32 %v429
    %v938 = vand.u32 %v934, 3
    %vm939 = vcmp.lt.s32.totalorder %v938, 2
    %vm940 = vcmp.eq.s32.totalorder %v938, 0
    %v941 = vxor.u32 %v936, 2147483648
    %v942 = vsel %vm940, %v935, %v941
    %vm943 = vcmp.eq.s32.totalorder %v938, 2
    %v944 = vxor.u32 %v935, 2147483648
    %v945 = vsel %vm943, %v944, %v936
    %v946 = vsel %vm939, %v942, %v945
    %v947 = vsel %vm937, nan, %v946
    %v948 = vand.u32 2147483647, %v430
    %vm949 = vcmp.le.f32.partialorder %v948, 0.7853982
    %vm950 = vcmp.lt.s32.totalorder %v430, 0
    %v951 = vand.u32 %v430, 2139095040
    %v952 = vshrl.u32 %v951, 23
    %v953 = vsub.s32 %v952, 127
    %v954 = vand.u32 2147483647, %v430
    %v955 = vand.u32 %v954, 8388607
    %v956 = vor.u32 %v955, 8388608
    %v957 = vsub.s32 0, %v956
    %v958 = vadd.s32 %v953, 1
    %vm959 = vcmp.gt.s32.totalorder %v958, 0
    %v960 = vsel %vm959, %v958, 0
    %v961 = vshrl.u32 %v960, 5
    %v962 = vand.u32 %v960, 31
    %v963 = vsub.s32 32, %v962
    %v964 = vshrl.u32 683565275, %v963
    %v965 = vshll.u32 683565275, %v962
    %v966 = vshrl.u32 2475754826, %v963
    %v967 = vor.u32 %v965, %v966
    %v968 = vshll.u32 2475754826, %v962
    %v969 = vshrl.u32 2131351028, %v963
    %v970 = vor.u32 %v968, %v969
    %v971 = vshll.u32 2131351028, %v962
    %v972 = vshrl.u32 2102212464, %v963
    %v973 = vor.u32 %v971, %v972
    %v974 = vshll.u32 2102212464, %v962
    %v975 = vshrl.u32 920167782, %v963
    %v976 = vor.u32 %v974, %v975
    %v977 = vshll.u32 920167782, %v962
    %v978 = vshrl.u32 1326507024, %v963
    %v979 = vor.u32 %v977, %v978
    %vm980 = vcmp.lt.s32.totalorder %v961, 1
    %vm981 = vcmp.lt.s32.totalorder %v961, 2
    %vm982 = vcmp.lt.s32.totalorder %v961, 3
    %vm983 = vcmp.lt.s32.totalorder %v961, 4
    %v984 = vsel %vm980, %v964, %v967
    %v985 = vsel %vm983, %v973, 2102212464
    %v986 = vsel %vm982, %v970, %v985
    %v987 = vsel %vm981, %v984, %v986
    %v988 = vsel %vm980, %v967, %v970
    %v989 = vsel %vm983, %v976, 920167782
    %v990 = vsel %vm982, %v973, %v989
    %v991 = vsel %vm981, %v988, %v990
    %v992 = vsel %vm980, %v970, %v973
    %v993 = vsel %vm983, %v979, 1326507024
    %v994 = vsel %vm982, %v976, %v993
    %v995 = vsel %vm981, %v992, %v994
    %v996 = vshll.u32 %v956, 8
    %v997 = vmul.u32.u64.compose %v996, %v995
    %v998 = vextract.low.u32 %v997
    %v999 = vextract.high.u32 %v997
    %v1000 = vmul.u32.u64.compose %v996, %v991
    %v1001 = vextract.low.u32 %v1000
    %v1002 = vextract.high.u32 %v1000
    %v1003 = vmul.u32 %v996, %v987
    %v1004 = vadd.s32 %v999, %v1001
    %vm1005 = vc.u32 %v999, %v1001
    %v1006 = vadd.s32 %v1002, 1
    %v1007 = vsel %vm1005, %v1006, %v1002
    %v1008 = vadd.s32 %v1003, %v1007
    %v1009 = vadd.s32 %v1008, 536870912
    %v1010 = vshrl.u32 %v1009, 30
    %v1011 = vshll.u32 %v1010, 30
    %v1012 = vsub.s32 %v1008, %v1011
    %vm1013 = vcmp.lt.s32.totalorder %v1012, 0
    %v1014 = vsub.s32 0, %v1012
    %v1015 = vsel %vm1013, %v1014, %v1012
    %v1016 = vclz %v1015
    %v1017 = vsub.s32 %v1016, 2
    %vm1018 = vcmp.gt.s32.totalorder 0, %v1017
    %v1019 = vsel %vm1018, 0, %v1017
    %v1020 = vsub.s32 32, %v1019
    %v1021 = vshll.u32 %v1012, %v1019
    %v1022 = vshrl.u32 %v1004, %v1020
    %v1023 = vor.u32 %v1021, %v1022
    %v1024 = vsub.s32 4294967266, %v1019
    %v1025 = vadd.s32 %v1024, 127
    %v1026 = vshll.u32 %v1025, 23
    %v1027 = vor.u32 4788187, %v1026
    %v1028 = vand.u32 2147483647, %v1027
    %v1030 = vcvt.s32.f32 %v1023
    %v1031 = vmul.f32 %v1030, %v1028
    %v1032 = vxor.u32 %v1031, 2147483648
    %v1033 = vsel %vm950, %v1032, %v1031
    %v1034 = vsub.s32 4, %v1010
    %v1035 = vsel %vm950, %v1034, %v1010
    %v1036 = vsel %vm949, %v430, %v1033
    %v1037 = vsel %vm949, 0, %v1035
    %v1038 = vcosq.f32.pop %v1036
    %v1039 = vsinq.f32.pop %v1036
    %vm1040 = vweird.f32 %v430
    %v1041 = vand.u32 %v1037, 3
    %vm1042 = vcmp.lt.s32.totalorder %v1041, 2
    %vm1043 = vcmp.eq.s32.totalorder %v1041, 0
    %v1044 = vxor.u32 %v1039, 2147483648
    %v1045 = vsel %vm1043, %v1038, %v1044
    %vm1046 = vcmp.eq.s32.totalorder %v1041, 2
    %v1047 = vxor.u32 %v1038, 2147483648
    %v1048 = vsel %vm1046, %v1047, %v1039
    %v1049 = vsel %vm1042, %v1045, %v1048
    %v1050 = vsel %vm1040, nan, %v1049
    %v1051 = vand.u32 2147483647, %v431
    %vm1052 = vcmp.le.f32.partialorder %v1051, 0.7853982
    %vm1053 = vcmp.lt.s32.totalorder %v431, 0
    %v1054 = vand.u32 %v431, 2139095040
    %v1055 = vshrl.u32 %v1054, 23
    %v1056 = vsub.s32 %v1055, 127
    %v1057 = vand.u32 2147483647, %v431
    %v1058 = vand.u32 %v1057, 8388607
    %v1059 = vor.u32 %v1058, 8388608
    %v1060 = vsub.s32 0, %v1059
    %v1061 = vadd.s32 %v1056, 1
    %vm1062 = vcmp.gt.s32.totalorder %v1061, 0
    %v1063 = vsel %vm1062, %v1061, 0
    %v1064 = vshrl.u32 %v1063, 5
    %v1065 = vand.u32 %v1063, 31
    %v1066 = vsub.s32 32, %v1065
    %v1067 = vshrl.u32 683565275, %v1066
    %v1068 = vshll.u32 683565275, %v1065
    %v1069 = vshrl.u32 2475754826, %v1066
    %v1070 = vor.u32 %v1068, %v1069
    %v1071 = vshll.u32 2475754826, %v1065
    %v1072 = vshrl.u32 2131351028, %v1066
    %v1073 = vor.u32 %v1071, %v1072
    %v1074 = vshll.u32 2131351028, %v1065
    %v1075 = vshrl.u32 2102212464, %v1066
    %v1076 = vor.u32 %v1074, %v1075
    %v1077 = vshll.u32 2102212464, %v1065
    %v1078 = vshrl.u32 920167782, %v1066
    %v1079 = vor.u32 %v1077, %v1078
    %v1080 = vshll.u32 920167782, %v1065
    %v1081 = vshrl.u32 1326507024, %v1066
    %v1082 = vor.u32 %v1080, %v1081
    %vm1083 = vcmp.lt.s32.totalorder %v1064, 1
    %vm1084 = vcmp.lt.s32.totalorder %v1064, 2
    %vm1085 = vcmp.lt.s32.totalorder %v1064, 3
    %vm1086 = vcmp.lt.s32.totalorder %v1064, 4
    %v1087 = vsel %vm1083, %v1067, %v1070
    %v1088 = vsel %vm1086, %v1076, 2102212464
    %v1089 = vsel %vm1085, %v1073, %v1088
    %v1090 = vsel %vm1084, %v1087, %v1089
    %v1091 = vsel %vm1083, %v1070, %v1073
    %v1092 = vsel %vm1086, %v1079, 920167782
    %v1093 = vsel %vm1085, %v1076, %v1092
    %v1094 = vsel %vm1084, %v1091, %v1093
    %v1095 = vsel %vm1083, %v1073, %v1076
    %v1096 = vsel %vm1086, %v1082, 1326507024
    %v1097 = vsel %vm1085, %v1079, %v1096
    %v1098 = vsel %vm1084, %v1095, %v1097
    %v1099 = vshll.u32 %v1059, 8
    %v1100 = vmul.u32.u64.compose %v1099, %v1098
    %v1101 = vextract.low.u32 %v1100
    %v1102 = vextract.high.u32 %v1100
    %v1103 = vmul.u32.u64.compose %v1099, %v1094
    %v1104 = vextract.low.u32 %v1103
    %v1105 = vextract.high.u32 %v1103
    %v1106 = vmul.u32 %v1099, %v1090
    %v1107 = vadd.s32 %v1102, %v1104
    %vm1108 = vc.u32 %v1102, %v1104
    %v1109 = vadd.s32 %v1105, 1
    %v1110 = vsel %vm1108, %v1109, %v1105
    %v1111 = vadd.s32 %v1106, %v1110
    %v1112 = vadd.s32 %v1111, 536870912
    %v1113 = vshrl.u32 %v1112, 30
    %v1114 = vshll.u32 %v1113, 30
    %v1115 = vsub.s32 %v1111, %v1114
    %vm1116 = vcmp.lt.s32.totalorder %v1115, 0
    %v1117 = vsub.s32 0, %v1115
    %v1118 = vsel %vm1116, %v1117, %v1115
    %v1119 = vclz %v1118
    %v1120 = vsub.s32 %v1119, 2
    %vm1121 = vcmp.gt.s32.totalorder 0, %v1120
    %v1122 = vsel %vm1121, 0, %v1120
    %v1123 = vsub.s32 32, %v1122
    %v1124 = vshll.u32 %v1115, %v1122
    %v1125 = vshrl.u32 %v1107, %v1123
    %v1126 = vor.u32 %v1124, %v1125
    %v1127 = vsub.s32 4294967266, %v1122
    %v1128 = vadd.s32 %v1127, 127
    %v1129 = vshll.u32 %v1128, 23
    %v1130 = vor.u32 4788187, %v1129
    %v1131 = vand.u32 2147483647, %v1130
    %v1133 = vcvt.s32.f32 %v1126
    %v1134 = vmul.f32 %v1133, %v1131
    %v1135 = vxor.u32 %v1134, 2147483648
    %v1136 = vsel %vm1053, %v1135, %v1134
    %v1137 = vsub.s32 4, %v1113
    %v1138 = vsel %vm1053, %v1137, %v1113
    %v1139 = vsel %vm1052, %v431, %v1136
    %v1140 = vsel %vm1052, 0, %v1138
    %v1141 = vcosq.f32.pop %v1139
    %v1142 = vsinq.f32.pop %v1139
    %vm1143 = vweird.f32 %v431
    %v1144 = vand.u32 %v1140, 3
    %vm1145 = vcmp.lt.s32.totalorder %v1144, 2
    %vm1146 = vcmp.eq.s32.totalorder %v1144, 0
    %v1147 = vxor.u32 %v1142, 2147483648
    %v1148 = vsel %vm1146, %v1141, %v1147
    %vm1149 = vcmp.eq.s32.totalorder %v1144, 2
    %v1150 = vxor.u32 %v1141, 2147483648
    %v1151 = vsel %vm1149, %v1150, %v1142
    %v1152 = vsel %vm1145, %v1148, %v1151
    %v1153 = vsel %vm1143, nan, %v1152
    %v1154 = vand.u32 2147483647, %v432
    %vm1155 = vcmp.le.f32.partialorder %v1154, 0.7853982
    %vm1156 = vcmp.lt.s32.totalorder %v432, 0
    %v1157 = vand.u32 %v432, 2139095040
    %v1158 = vshrl.u32 %v1157, 23
    %v1159 = vsub.s32 %v1158, 127
    %v1160 = vand.u32 2147483647, %v432
    %v1161 = vand.u32 %v1160, 8388607
    %v1162 = vor.u32 %v1161, 8388608
    %v1163 = vsub.s32 0, %v1162
    %v1164 = vadd.s32 %v1159, 1
    %vm1165 = vcmp.gt.s32.totalorder %v1164, 0
    %v1166 = vsel %vm1165, %v1164, 0
    %v1167 = vshrl.u32 %v1166, 5
    %v1168 = vand.u32 %v1166, 31
    %v1169 = vsub.s32 32, %v1168
    %v1170 = vshrl.u32 683565275, %v1169
    %v1171 = vshll.u32 683565275, %v1168
    %v1172 = vshrl.u32 2475754826, %v1169
    %v1173 = vor.u32 %v1171, %v1172
    %v1174 = vshll.u32 2475754826, %v1168
    %v1175 = vshrl.u32 2131351028, %v1169
    %v1176 = vor.u32 %v1174, %v1175
    %v1177 = vshll.u32 2131351028, %v1168
    %v1178 = vshrl.u32 2102212464, %v1169
    %v1179 = vor.u32 %v1177, %v1178
    %v1180 = vshll.u32 2102212464, %v1168
    %v1181 = vshrl.u32 920167782, %v1169
    %v1182 = vor.u32 %v1180, %v1181
    %v1183 = vshll.u32 920167782, %v1168
    %v1184 = vshrl.u32 1326507024, %v1169
    %v1185 = vor.u32 %v1183, %v1184
    %vm1186 = vcmp.lt.s32.totalorder %v1167, 1
    %vm1187 = vcmp.lt.s32.totalorder %v1167, 2
    %vm1188 = vcmp.lt.s32.totalorder %v1167, 3
    %vm1189 = vcmp.lt.s32.totalorder %v1167, 4
    %v1190 = vsel %vm1186, %v1170, %v1173
    %v1191 = vsel %vm1189, %v1179, 2102212464
    %v1192 = vsel %vm1188, %v1176, %v1191
    %v1193 = vsel %vm1187, %v1190, %v1192
    %v1194 = vsel %vm1186, %v1173, %v1176
    %v1195 = vsel %vm1189, %v1182, 920167782
    %v1196 = vsel %vm1188, %v1179, %v1195
    %v1197 = vsel %vm1187, %v1194, %v1196
    %v1198 = vsel %vm1186, %v1176, %v1179
    %v1199 = vsel %vm1189, %v1185, 1326507024
    %v1200 = vsel %vm1188, %v1182, %v1199
    %v1201 = vsel %vm1187, %v1198, %v1200
    %v1202 = vshll.u32 %v1162, 8
    %v1203 = vmul.u32.u64.compose %v1202, %v1201
    %v1204 = vextract.low.u32 %v1203
    %v1205 = vextract.high.u32 %v1203
    %v1206 = vmul.u32.u64.compose %v1202, %v1197
    %v1207 = vextract.low.u32 %v1206
    %v1208 = vextract.high.u32 %v1206
    %v1209 = vmul.u32 %v1202, %v1193
    %v1210 = vadd.s32 %v1205, %v1207
    %vm1211 = vc.u32 %v1205, %v1207
    %v1212 = vadd.s32 %v1208, 1
    %v1213 = vsel %vm1211, %v1212, %v1208
    %v1214 = vadd.s32 %v1209, %v1213
    %v1215 = vadd.s32 %v1214, 536870912
    %v1216 = vshrl.u32 %v1215, 30
    %v1217 = vshll.u32 %v1216, 30
    %v1218 = vsub.s32 %v1214, %v1217
    %vm1219 = vcmp.lt.s32.totalorder %v1218, 0
    %v1220 = vsub.s32 0, %v1218
    %v1221 = vsel %vm1219, %v1220, %v1218
    %v1222 = vclz %v1221
    %v1223 = vsub.s32 %v1222, 2
    %vm1224 = vcmp.gt.s32.totalorder 0, %v1223
    %v1225 = vsel %vm1224, 0, %v1223
    %v1226 = vsub.s32 32, %v1225
    %v1227 = vshll.u32 %v1218, %v1225
    %v1228 = vshrl.u32 %v1210, %v1226
    %v1229 = vor.u32 %v1227, %v1228
    %v1230 = vsub.s32 4294967266, %v1225
    %v1231 = vadd.s32 %v1230, 127
    %v1232 = vshll.u32 %v1231, 23
    %v1233 = vor.u32 4788187, %v1232
    %v1234 = vand.u32 2147483647, %v1233
    %v1236 = vcvt.s32.f32 %v1229
    %v1237 = vmul.f32 %v1236, %v1234
    %v1238 = vxor.u32 %v1237, 2147483648
    %v1239 = vsel %vm1156, %v1238, %v1237
    %v1240 = vsub.s32 4, %v1216
    %v1241 = vsel %vm1156, %v1240, %v1216
    %v1242 = vsel %vm1155, %v432, %v1239
    %v1243 = vsel %vm1155, 0, %v1241
    %v1244 = vcosq.f32.pop %v1242
    %v1245 = vsinq.f32.pop %v1242
    %vm1246 = vweird.f32 %v432
    %v1247 = vand.u32 %v1243, 3
    %vm1248 = vcmp.lt.s32.totalorder %v1247, 2
    %vm1249 = vcmp.eq.s32.totalorder %v1247, 0
    %v1250 = vxor.u32 %v1245, 2147483648
    %v1251 = vsel %vm1249, %v1244, %v1250
    %vm1252 = vcmp.eq.s32.totalorder %v1247, 2
    %v1253 = vxor.u32 %v1244, 2147483648
    %v1254 = vsel %vm1252, %v1253, %v1245
    %v1255 = vsel %vm1248, %v1251, %v1254
    %v1256 = vsel %vm1246, nan, %v1255
    %v1257 = vmul.f32 %v417, %v535
    %v1258 = vmul.f32 %v418, %v638
    %v1259 = vmul.f32 %v419, %v741
    %v1260 = vmul.f32 %v420, %v844
    %v1261 = vmul.f32 %v421, %v947
    %v1262 = vmul.f32 %v422, %v1050
    %v1263 = vmul.f32 %v423, %v1153
    %v1264 = vmul.f32 %v424, %v1256
    %v1265 = vld [vmem:[#allocation4] sm:$0xff]
    %v1266 = vld [vmem:[#allocation4 + $0x8] sm:$0xff]
    %v1275 = vcombine.low %v1257, %v1258
    %v1276 = vcombine.low %v1259, %v1260
    %v1278 = vunpack.c.l.s4 1983009808
    %v1279 = vunpack.c.0.s8 %v1278
    %v1280 = vlaneseq
    %v1281 = vshrl.u32 %v1280, 7
    %v1282 = vsub.s32 %v1279, %v1281
    %v1283 = vrot.slane %v1275, %v1282
    %v1285 = vunpack.c.l.s4 1983009808
    %v1286 = vunpack.c.0.s8 %v1285
    %v1287 = vlaneseq
    %v1288 = vshrl.u32 %v1287, 7
    %v1289 = vsub.s32 %v1286, %v1288
    %v1290 = vrot.slane %v1276, %v1289
    %v1291 = vcombine.low %v1283, %v1290
    %v1292 = vcombine.low %v1261, %v1262
    %v1293 = vcombine.low %v1263, %v1264
    %v1295 = vunpack.c.l.s4 1983009808
    %v1296 = vunpack.c.0.s8 %v1295
    %v1297 = vlaneseq
    %v1298 = vshrl.u32 %v1297, 7
    %v1299 = vsub.s32 %v1296, %v1298
    %v1300 = vrot.slane %v1292, %v1299
    %v1302 = vunpack.c.l.s4 1983009808
    %v1303 = vunpack.c.0.s8 %v1302
    %v1304 = vlaneseq
    %v1305 = vshrl.u32 %v1304, 7
    %v1306 = vsub.s32 %v1303, %v1305
    %v1307 = vrot.slane %v1293, %v1306
    %v1308 = vcombine.low %v1300, %v1307
    %v1311 = vadd.f32 %v1265, %v1291
    %v1312 = vadd.f32 %v1266, %v1308
    %1313 = vst [vmem:[#allocation7] sm:$0xff] %v1311
    %1314 = vst [vmem:[#allocation7 + $0x8] sm:$0xff] %v1312
    // Predicated region
    $region10: #{tpu_custom_call.1} parent=1 // pred_check
      _
    $region11: #{tpu_custom_call.1} parent=1 // pred_check_branch
      %1316 = sbr.rel (0) target = $region13
    $region12: #{tpu_custom_call.1} parent=1 // pred_region
      %s1318 = ssub.s32 256, 256
      %1319 = vsyncadd [#allocation6], %s1318
      %s1321 = sshll.u32 [#allocation7], 4
      %s1322 = int_to_ptr.vmem [resolvable:$true] %s1321
      %1324 = dma.vmem_to_hbm [thread:$0]  %s1322, 256, %s2, [#allocation6]
    $region13: #{tpu_custom_call.1} parent=1 // pred_fallthru
      _
    // Predicated region
    $region14: #{tpu_custom_call.1} parent=1 // pred_check
      _
    $region15: #{tpu_custom_call.1} parent=1 // pred_check_branch
      %1326 = sbr.rel (0) target = $region17
    $region16: #{tpu_custom_call.1} parent=1 // pred_region
      %1327 = dma.done [#allocation6], 256
    $region17: #{tpu_custom_call.1} parent=1 // pred_fallthru
      _
    %1328 = vsyncpa [#allocation5], 1
    %1329 = vsyncpa [#allocation6], 1

</llo_original>
